<compile_context>
chip_gen: v6e
topology: v6e:2x2x1
jax: 0.10.0
libtpu: 0.0.40
codegen_flags: <defaults>
</compile_context>

<pallas_src>
import functools
import math

import jax
import jax.numpy as jnp
from jax.experimental import pallas as pl
from jax.experimental.pallas import tpu as pltpu

REF = 1.0
AMIN = 1e-10
TOP_DB = 80.0

_LANES = 1024           # lane-dense last dim (multiple of 128)
_MAX_TILE_ROWS = 512    # (512, 1024) f32 = 2 MiB per tile
_VMEM_LIMIT = 32 * 1024 * 1024


def _round_up(x, m):
    return ((x + m - 1) // m) * m


def _max_kernel(x_ref, pmax_ref):
    # Per-block partial max of the raw power values.  Written as a full
    # (8, 128) tile so the output stays layout-friendly; the final reduction
    # over num_blocks is a tiny jnp.max in the wrapper.
    tile_max = jnp.max(x_ref[...])
    pmax_ref[...] = jnp.full(pmax_ref.shape, tile_max, dtype=pmax_ref.dtype)


def _db_kernel(floor_ref, x_ref, out_ref, *, amin, ref_offset):
    x = x_ref[...]
    db = 10.0 * jnp.log10(jnp.maximum(x, amin)) - ref_offset
    out_ref[...] = jnp.maximum(db, floor_ref[0, 0])


def power_to_db(S, ref=REF, amin=AMIN, top_db=TOP_DB):
    if amin <= 0:
        raise ValueError("amin must be strictly positive")
    if top_db is not None and top_db < 0:
        raise ValueError("top_db must be non-negative")

    # TODO(synk): callable `ref` and the complex-input warning path of the
    # PyTorch module are not supported (scalar real ref / real power input).
    S = jnp.asarray(S, jnp.float32)
    orig_shape = S.shape
    n = S.size

    # ref is a plain Python scalar -> host constant offset.
    ref_offset = 10.0 * math.log10(max(abs(float(ref)), float(amin)))

    # Lane-dense 2-D view with MiB-scale tiles.
    ncols = _LANES
    nrows = -(-n // ncols)
    if nrows <= _MAX_TILE_ROWS:
        tile_rows = max(nrows, 1)
        nrows = tile_rows
    else:
        tile_rows = _MAX_TILE_ROWS
        nrows = _round_up(nrows, tile_rows)
    padded_n = nrows * ncols

    flat = S.reshape(-1)
    if padded_n != n:
        # Pad with 0: max(0, amin) = amin -> smallest possible dB value, so a
        # padded element can never win the global max.
        flat = jnp.pad(flat, (0, padded_n - n))
    x2d = flat.reshape(nrows, ncols)

    num_blocks = nrows // tile_rows
    cparams = pltpu.CompilerParams(
        dimension_semantics=("parallel",),
        vmem_limit_bytes=_VMEM_LIMIT,
    )

    if top_db is not None:
        # Pass 1: per-block max of raw power.  log10 monotonicity gives
        # max(log_spec) = 10*log10(max(max(S), amin)) - ref_offset.
        pmax = pl.pallas_call(
            _max_kernel,
            out_shape=jax.ShapeDtypeStruct((8 * num_blocks, 128), jnp.float32),
            grid=(num_blocks,),
            in_specs=[pl.BlockSpec((tile_rows, ncols), lambda i: (i, 0))],
            out_specs=pl.BlockSpec((8, 128), lambda i: (i, 0)),
            compiler_params=cparams,
        )(x2d)
        s_max = jnp.max(pmax)
        gmax_db = 10.0 * jnp.log10(jnp.maximum(s_max, jnp.float32(amin))) - ref_offset
        floor = gmax_db - top_db
    else:
        floor = jnp.float32(-jnp.inf)

    floor_arr = jnp.reshape(floor, (1, 1)).astype(jnp.float32)

    # Pass 2: fused dB conversion + clamp, one read of S, one write of out.
    out2d = pl.pallas_call(
        functools.partial(_db_kernel, amin=amin, ref_offset=ref_offset),
        out_shape=jax.ShapeDtypeStruct((nrows, ncols), jnp.float32),
        grid=(num_blocks,),
        in_specs=[
            pl.BlockSpec(memory_space=pltpu.MemorySpace.SMEM),     # (1,1) floor
            pl.BlockSpec((tile_rows, ncols), lambda i: (i, 0)),
        ],
        out_specs=pl.BlockSpec((tile_rows, ncols), lambda i: (i, 0)),
        compiler_params=cparams,
    )(floor_arr, x2d)

    out_flat = out2d.reshape(-1)
    if padded_n != n:
        out_flat = out_flat[:n]
    return out_flat.reshape(orig_shape)


def power_to_db_ref(S, ref=REF, amin=AMIN, top_db=TOP_DB):
    """Pure-JAX reference matching the PyTorch module."""
    mag = jnp.asarray(S, jnp.float32)
    log_spec = 10.0 * jnp.log10(jnp.maximum(mag, amin))
    log_spec = log_spec - 10.0 * jnp.log10(
        jnp.maximum(jnp.abs(jnp.float32(ref)), jnp.float32(amin))
    )
    if top_db is not None:
        log_spec = jnp.maximum(log_spec, jnp.max(log_spec) - top_db)
    return log_spec


if __name__ == "__main__":
    key = jax.random.PRNGKey(0)
    # Power spectrogram is non-negative; include a tiny value to exercise amin.
    x = jax.random.uniform(key, (2, 4, 16, 16), jnp.float32, minval=0.0, maxval=10.0)
    x = x.at[0, 0, 0, 0].set(1e-12)

    out = jax.block_until_ready(power_to_db(x))
    ref_out = power_to_db_ref(x)
    assert out.shape == ref_out.shape and out.dtype == jnp.float32
    assert jnp.allclose(out, ref_out, rtol=1e-5, atol=1e-4), (
        float(jnp.max(jnp.abs(out - ref_out)))
    )

    # Exercise the padded, multi-block path (odd element count, >1 grid step).
    x2 = jax.random.uniform(
        jax.random.PRNGKey(0), (1, 3, 700, 300), jnp.float32, minval=0.0, maxval=5.0
    )
    out2 = jax.block_until_ready(power_to_db(x2))
    ref2 = power_to_db_ref(x2)
    assert jnp.allclose(out2, ref2, rtol=1e-5, atol=1e-4), (
        float(jnp.max(jnp.abs(out2 - ref2)))
    )

    print("KERNEL_OK")
</pallas_src>

<mosaic_0001>
module attributes {stable_mosaic.version = 11 : i64} {
  func.func @_max_kernel(%arg0: i32, %arg1: memref<2x1024xf32, #tpu.memory_space<vmem>>, %arg2: memref<8x128xf32, #tpu.memory_space<vmem>>) attributes {dimension_semantics = [#tpu.dimension_semantics<parallel>], iteration_bounds = array<i64: 1>, scalar_prefetch = 0 : i64, scratch_operands = 0 : i64, tpu.core_type = #tpu.core_type<tc>, window_params = [{transform_indices = @transform_0, window_bounds = array<i64: 2, 1024>}, {transform_indices = @transform_1, window_bounds = array<i64: 8, 128>}]} {
    %c0 = arith.constant 0 : index
    %c0_0 = arith.constant 0 : index
    %0 = vector.load %arg1[%c0, %c0_0] : memref<2x1024xf32, #tpu.memory_space<vmem>>, vector<2x1024xf32>
    %1 = vector.shape_cast %0 : vector<2x1024xf32> to vector<1x2x1024xf32>
    %cst = arith.constant dense<0xFF800000> : vector<1xf32>
    %2 = vector.multi_reduction <maximumf>, %1, %cst [1, 2] : vector<1x2x1024xf32> to vector<1xf32>
    %3 = vector.shape_cast %2 : vector<1xf32> to vector<1x1x1xf32>
    %4 = vector.extract %3[0, 0, 0] : f32 from vector<1x1x1xf32>
    %5 = vector.broadcast %4 : f32 to vector<8x128xf32>
    %c0_1 = arith.constant 0 : index
    %c0_2 = arith.constant 0 : index
    %6 = vector.load %arg2[%c0_1, %c0_2] : memref<8x128xf32, #tpu.memory_space<vmem>>, vector<8x128xf32>
    tpu.vector_store %arg2[%c0_1, %c0_2], %5 {strides = array<i32>} : memref<8x128xf32, #tpu.memory_space<vmem>>, vector<8x128xf32>,
    return
  }
  func.func @transform_0(%arg0: i32) -> (i32, i32) {
    %c0_i32 = arith.constant 0 : i32
    %c0_i32_0 = arith.constant 0 : i32
    return %arg0, %c0_i32 : i32, i32
  }
  func.func @transform_1(%arg0: i32) -> (i32, i32) {
    %c0_i32 = arith.constant 0 : i32
    %c0_i32_0 = arith.constant 0 : i32
    return %arg0, %c0_i32 : i32, i32
  }
}

</mosaic_0001>

<llo_original>
// kernel: tpu_custom_call.1
$region0: #{tpu_custom_call.1}
  #allocation0 [shape = 'u32[]', space=smem, size = 0x4, offset = 0x4, fixed_abs, tag = 'smem constant byte address 0x4 - core index']
  #allocation1 [shape = 'u32[144,128]{1,0:T(1,128)}', space=vmem, size = 0x12000, scoped, tag = 'internal scratch']
  %s0 = inlined_call_operand.hbm [shape: f32[2,1024], index: 0, kind: input, shape index: {}]
  %s1 = inlined_call_operand.hbm [shape: f32[8,128], index: 1, kind: output, shape index: {}]
  %s2 = sld [smem:[#allocation0]]
  $region18: #{tpu_custom_call.1} parent=0
    _
  %s4 = ssub.s32 1, %s2
  %s5 = scalar_select 0, %s4, %s2
  $region1: #{tpu_custom_call.1} parent=0
    #allocation2 [shape = 'u8[8192]{0}', space=vmem, size = 0x2000, scoped, tag = 'input window, operand 0, single buffered']
    #allocation3 [shape = 's32[1]{0}', space=sflag, size = 0x4, scoped, tag = 'scoped memory for tpu_custom_call.1']
    #allocation4 [shape = 's32[1]{0}', space=sflag, size = 0x4, scoped, tag = 'scoped memory for tpu_custom_call.1']
    #allocation5 [shape = 'u8[4096]{0}', space=vmem, size = 0x1000, scoped, tag = 'output window, operand 0, single buffered']
    %6 = vsyncpa [#allocation3], 0
    %7 = vsyncpa [#allocation4], 0
    // Predicated region
    $region2: #{tpu_custom_call.1} parent=1 // pred_check
      _
    $region3: #{tpu_custom_call.1} parent=1 // pred_check_branch
      %9 = sbr.rel (0) target = $region5
    $region4: #{tpu_custom_call.1} parent=1 // pred_region
      %s11 = ssub.s32 256, 256
      %12 = vsyncadd [#allocation3], %s11
      %s14 = sshll.u32 [#allocation2], 4
      %s15 = int_to_ptr.vmem [resolvable:$true] %s14
      %17 = dma.hbm_to_vmem [thread:$0]  %s0, 256, %s15, [#allocation3]
    $region5: #{tpu_custom_call.1} parent=1 // pred_fallthru
      _
    // Predicated region
    $region6: #{tpu_custom_call.1} parent=1 // pred_check
      _
    $region7: #{tpu_custom_call.1} parent=1 // pred_check_branch
      %19 = sbr.rel (0) target = $region9
    $region8: #{tpu_custom_call.1} parent=1 // pred_region
      %20 = dma.done [#allocation3], 256
    $region9: #{tpu_custom_call.1} parent=1 // pred_fallthru
      _
    %v21 = vld [vmem:[#allocation2] sm:$0xff]
    %v22 = vld [vmem:[#allocation2 + $0x8] sm:$0xff]
    %v25 = vcombine.high %v21, %v21
    %v27 = vunpack.c.l.s4 1983009808
    %v28 = vunpack.c.0.s8 %v27
    %v29 = vlaneseq
    %v30 = vshrl.u32 %v29, 7
    %v31 = vsub.s32 %v28, %v30
    %v32 = vrot.slane %v21, %v31
    %v34 = vunpack.c.l.s4 1983009808
    %v35 = vunpack.c.0.s8 %v34
    %v36 = vlaneseq
    %v37 = vshrl.u32 %v36, 7
    %v38 = vsub.s32 %v35, %v37
    %v39 = vrot.slane %v25, %v38
    %v40 = vcombine.high %v32, %v32
    %v41 = vcombine.high %v39, %v39
    %v42 = vcombine.high %v22, %v22
    %v44 = vunpack.c.l.s4 1983009808
    %v45 = vunpack.c.0.s8 %v44
    %v46 = vlaneseq
    %v47 = vshrl.u32 %v46, 7
    %v48 = vsub.s32 %v45, %v47
    %v49 = vrot.slane %v22, %v48
    %v51 = vunpack.c.l.s4 1983009808
    %v52 = vunpack.c.0.s8 %v51
    %v53 = vlaneseq
    %v54 = vshrl.u32 %v53, 7
    %v55 = vsub.s32 %v52, %v54
    %v56 = vrot.slane %v42, %v55
    %v57 = vcombine.high %v49, %v49
    %v58 = vcombine.high %v56, %v56
    %vm67 = vcmask 1041408
    %v68 = vsel %vm67, %v32, -inf
    %v69 = vsel %vm67, %v40, -inf
    %v70 = vsel %vm67, %v39, -inf
    %v71 = vsel %vm67, %v41, -inf
    %v72 = vsel %vm67, %v49, -inf
    %v73 = vmax.f32 %v68, %v72
    %v74 = vsel %vm67, %v57, -inf
    %v75 = vmax.f32 %v69, %v74
    %v76 = vsel %vm67, %v56, -inf
    %v77 = vmax.f32 %v70, %v76
    %v78 = vsel %vm67, %v58, -inf
    %v79 = vmax.f32 %v71, %v78
    %v80 = vmax.f32 %v73, %v75
    %v81 = vmax.f32 %v77, %v79
    %v82 = vmax.f32 %v80, %v81
    %83 = vmax.xlane.f32.xlu0 %v82
    %v84 = vpop.xlane.xlu0 %83
    %v85 = vrot.slane %v84, 4
    %v86 = vmax.f32 %v84, %v85
    %v87 = vrot.slane %v86, 2
    %v88 = vmax.f32 %v86, %v87
    %v89 = vrot.slane %v88, 1
    %v90 = vmax.f32 %v88, %v89
    %s91 = vtos %v90
    %v92 = vstv %s91
    %93 = vst [vmem:[#allocation5] sm:$0xff] %v92
    // Predicated region
    $region10: #{tpu_custom_call.1} parent=1 // pred_check
      _
    $region11: #{tpu_custom_call.1} parent=1 // pred_check_branch
      %95 = sbr.rel (0) target = $region13
    $region12: #{tpu_custom_call.1} parent=1 // pred_region
      %s97 = ssub.s32 128, 128
      %98 = vsyncadd [#allocation4], %s97
      %s100 = sshll.u32 [#allocation5], 4
      %s101 = int_to_ptr.vmem [resolvable:$true] %s100
      %103 = dma.vmem_to_hbm [thread:$0]  %s101, 128, %s1, [#allocation4]
    $region13: #{tpu_custom_call.1} parent=1 // pred_fallthru
      _
    // Predicated region
    $region14: #{tpu_custom_call.1} parent=1 // pred_check
      _
    $region15: #{tpu_custom_call.1} parent=1 // pred_check_branch
      %105 = sbr.rel (0) target = $region17
    $region16: #{tpu_custom_call.1} parent=1 // pred_region
      %106 = dma.done [#allocation4], 128
    $region17: #{tpu_custom_call.1} parent=1 // pred_fallthru
      _
    %107 = vsyncpa [#allocation3], 1
    %108 = vsyncpa [#allocation4], 1

</llo_original>
